<compile_context>
chip_gen: v5e
topology: v5e:2x2
jax: 0.10.0
libtpu: 0.0.40
codegen_flags: <defaults>
</compile_context>

<pallas_src>
import functools

import jax
import jax.numpy as jnp
from jax.experimental import pallas as pl
from jax.experimental.pallas import tpu as pltpu


# ----------------------------- Pallas kernel ------------------------------- #

def _tsm_shift_kernel(x_ref, o_ref, *, fold, c_tile, has_passthrough):
    # x_ref / o_ref: (1, S, c_tile, hw_t).  Channel tile cj covers absolute
    # channels [cj*c_tile, (cj+1)*c_tile).
    S = x_ref.shape[1]
    hw_t = x_ref.shape[3]

    c0 = pl.program_id(1) * c_tile                     # absolute channel offset of this tile
    c_idx = c0 + jax.lax.broadcasted_iota(jnp.int32, (c_tile, 1), 0)
    in_lo = c_idx < fold                               # take from t+1
    in_hi = c_idx < 2 * fold                           # (and not lo) take from t-1

    zeros = jnp.zeros((c_tile, hw_t), x_ref.dtype)

    # S is small (e.g. 8/16): static unrolled loop, per-timestep temporaries only.
    for t in range(S):
        x_next = x_ref[0, t + 1] if t + 1 < S else zeros
        x_prev = x_ref[0, t - 1] if t >= 1 else zeros
        if has_passthrough:
            out = jnp.where(in_lo, x_next, jnp.where(in_hi, x_prev, x_ref[0, t]))
        else:
            out = jnp.where(in_lo, x_next, x_prev)
        o_ref[0, t] = out


# ------------------------------ tile picking -------------------------------- #

def _pick_tiles(S, c_cov, hw, itemsize, budget):
    """Pick (c_tile, hw_tile) so one block (S * c_tile * hw_tile * itemsize) stays
    under `budget`.  Prefer channel tiling (multiples of 8) so the lane axis stays
    full/dense even for hw that is not a multiple of 128."""
    def nbytes(ct, hwt):
        return S * ct * hwt * itemsize

    c_tile = c_cov
    if nbytes(c_tile, hw) > budget and c_cov % 8 == 0:
        ct = c_cov
        while ct > 8 and nbytes(ct, hw) > budget:
            nxt = ct - 8
            while nxt > 8 and c_cov % nxt:
                nxt -= 8
            if c_cov % nxt:
                break
            ct = nxt
        c_tile = ct

    hw_tile = hw
    if nbytes(c_tile, hw_tile) > budget and hw % 128 == 0:
        hwt = max(128, (budget // (S * c_tile * itemsize)) // 128 * 128)
        while hwt > 128 and hw % hwt:
            hwt -= 128
        if hw % hwt == 0:
            hw_tile = hwt

    return c_tile, hw_tile


# --------------------------------- wrapper ----------------------------------- #

def tsm_shift(x, n_segment, fold_div=8, *, block_budget_bytes=2 << 20):
    """TSM.shift for integer n_segment as one Pallas pass.

    NOTE: the output aliases the input buffer (input_output_aliases); donate `x`
    at the jit level and do not reuse it afterwards.
    """
    nt, c, h, w = x.shape
    assert nt % n_segment == 0, "nt must be divisible by n_segment"
    n_batch = nt // n_segment
    hw = h * w
    fold = c // fold_div
    if fold == 0:                      # all channels pass-through -> identity
        return x

    x5 = x.reshape(n_batch, n_segment, c, hw)
    itemsize = x.dtype.itemsize

    # Channels actually touched by the shift.  If 2*fold is sublane-aligned we only
    # read/write those; the aliased output keeps channels [2*fold, c) untouched in HBM.
    two_fold = 2 * fold
    if two_fold < c and two_fold % 8 == 0:
        c_cov, has_passthrough = two_fold, False
    else:
        c_cov, has_passthrough = c, two_fold < c

    c_tile, hw_tile = _pick_tiles(n_segment, c_cov, hw, itemsize, block_budget_bytes)
    n_c = c_cov // c_tile
    n_hw = hw // hw_tile

    # v7x megacore: make sure there are at least two parallel grid units.
    if n_batch * n_c * n_hw < 2:
        if c_tile % 16 == 0:
            c_tile //= 2
            n_c = 2
        elif hw_tile % 256 == 0:
            hw_tile //= 2
            n_hw = 2

    grid = (n_batch, n_c, n_hw)
    kernel = functools.partial(_tsm_shift_kernel, fold=fold, c_tile=c_tile,
                               has_passthrough=has_passthrough)

    out5 = pl.pallas_call(
        kernel,
        grid=grid,
        in_specs=[pl.BlockSpec((1, n_segment, c_tile, hw_tile),
                               lambda b, cj, hj: (b, 0, cj, hj))],
        out_specs=pl.BlockSpec((1, n_segment, c_tile, hw_tile),
                               lambda b, cj, hj: (b, 0, cj, hj)),
        out_shape=jax.ShapeDtypeStruct(x5.shape, x.dtype),
        input_output_aliases={0: 0},
        compiler_params=pltpu.CompilerParams(
            dimension_semantics=("parallel", "parallel", "parallel"),
            vmem_limit_bytes=32 * 1024 * 1024),
    )(x5)
    return out5.reshape(nt, c, h, w)


def tsm_forward(x, n_segment, fold_div=8):
    """TSM.forward(x, n_segment)."""
    if isinstance(n_segment, int):
        return tsm_shift(x, n_segment, fold_div=fold_div)
    # TODO(synk): tensor-valued n_segment branch uses boolean indexing with
    # data-dependent shapes (x = x[bool_list]); no static Pallas equivalent.
    raise NotImplementedError("tensor-valued n_segment is not supported")


# ------------------------- pure-JAX reference check ------------------------- #

def _tsm_shift_ref(x, n_segment, fold_div=8):
    nt, c, h, w = x.shape
    nb = nt // n_segment
    x5 = x.reshape(nb, n_segment, c, h, w)
    fold = c // fold_div
    out = jnp.zeros_like(x5)
    out = out.at[:, :-1, :fold].set(x5[:, 1:, :fold])
    out = out.at[:, 1:, fold:2 * fold].set(x5[:, :-1, fold:2 * fold])
    out = out.at[:, :, 2 * fold:].set(x5[:, :, 2 * fold:])
    return out.reshape(nt, c, h, w)


# --------------------------------- main -------------------------------------- #

if __name__ == "__main__":
    n_segment = 8
    n_batch = 2                     # video clips
    nt = n_batch * n_segment        # frames
    C = 32                          # fold_div=8 -> fold=4, 2*fold=8 (sublane-aligned)
    H = W = 16                      # H*W = 256 (lane-dense)

    key = jax.random.PRNGKey(0)
    x = jax.random.normal(key, (nt, C, H, W), jnp.float32)

    # Reference computed (and materialized) before x is donated to the kernel.
    ref = _tsm_shift_ref(x, n_segment)
    jax.block_until_ready(ref)

    fwd = jax.jit(functools.partial(tsm_forward, n_segment=n_segment),
                  donate_argnums=0)
    out = fwd(x)
    jax.block_until_ready(out)

    assert out.shape == (nt, C, H, W)
    assert bool(jnp.all(out == ref)), "Pallas TSM output mismatch vs reference"
    print("KERNEL_OK")
</pallas_src>

<mosaic_0001>
module attributes {stable_mosaic.version = 11 : i64} {
  func.func @_tsm_shift_kernel(%arg0: i32, %arg1: i32, %arg2: i32, %arg3: memref<1x8x8x256xf32, #tpu.memory_space<vmem>>, %arg4: memref<1x8x8x256xf32, #tpu.memory_space<vmem>>) attributes {dimension_semantics = [#tpu.dimension_semantics<parallel>, #tpu.dimension_semantics<parallel>, #tpu.dimension_semantics<parallel>], iteration_bounds = array<i64: 2, 1, 1>, scalar_prefetch = 0 : i64, scratch_operands = 0 : i64, tpu.core_type = #tpu.core_type<tc>, window_params = [{transform_indices = @transform_0, window_bounds = array<i64: 1, 8, 8, 256>}, {transform_indices = @transform_1, window_bounds = array<i64: 1, 8, 8, 256>}]} {
    %c8_i32 = arith.constant 8 : i32
    %0 = arith.muli %arg1, %c8_i32 : i32
    %1 = tpu.iota {dimensions = array<i32: 0>} : vector<8x1xi32>
    %2 = vector.broadcast %0 : i32 to vector<8x1xi32>
    %3 = arith.addi %2, %1 : vector<8x1xi32>
    %c4_i32 = arith.constant 4 : i32
    %4 = vector.broadcast %c4_i32 : i32 to vector<8x1xi32>
    %5 = arith.cmpi slt, %3, %4 : vector<8x1xi32>
    %cst = arith.constant 0.000000e+00 : f32
    %6 = vector.broadcast %cst : f32 to vector<8x256xf32>
    %c0 = arith.constant 0 : index
    %c1 = arith.constant 1 : index
    %c0_0 = arith.constant 0 : index
    %c0_1 = arith.constant 0 : index
    %7 = vector.load %arg3[%c0, %c1, %c0_0, %c0_1] : memref<1x8x8x256xf32, #tpu.memory_space<vmem>>, vector<1x1x8x256xf32>
    %8 = vector.shape_cast %7 : vector<1x1x8x256xf32> to vector<8x256xf32>
    %9 = vector.shape_cast %5 : vector<8x1xi1> to vector<8x1xi1>
    %10 = vector.broadcast %9 : vector<8x1xi1> to vector<8x256xi1>
    %11 = arith.select %10, %8, %6 : vector<8x256xi1>, vector<8x256xf32>
    %c0_2 = arith.constant 0 : index
    %c0_3 = arith.constant 0 : index
    %c0_4 = arith.constant 0 : index
    %c0_5 = arith.constant 0 : index
    %12 = vector.load %arg4[%c0_2, %c0_3, %c0_4, %c0_5] : memref<1x8x8x256xf32, #tpu.memory_space<vmem>>, vector<1x1x8x256xf32>
    %13 = vector.shape_cast %12 : vector<1x1x8x256xf32> to vector<8x256xf32>
    %14 = vector.shape_cast %11 : vector<8x256xf32> to vector<1x1x8x256xf32>
    tpu.vector_store %arg4[%c0_2, %c0_3, %c0_4, %c0_5], %14 {strides = array<i32>} : memref<1x8x8x256xf32, #tpu.memory_space<vmem>>, vector<1x1x8x256xf32>,
    %c0_6 = arith.constant 0 : index
    %c2 = arith.constant 2 : index
    %c0_7 = arith.constant 0 : index
    %c0_8 = arith.constant 0 : index
    %15 = vector.load %arg3[%c0_6, %c2, %c0_7, %c0_8] : memref<1x8x8x256xf32, #tpu.memory_space<vmem>>, vector<1x1x8x256xf32>
    %16 = vector.shape_cast %15 : vector<1x1x8x256xf32> to vector<8x256xf32>
    %c0_9 = arith.constant 0 : index
    %c0_10 = arith.constant 0 : index
    %c0_11 = arith.constant 0 : index
    %c0_12 = arith.constant 0 : index
    %17 = vector.load %arg3[%c0_9, %c0_10, %c0_11, %c0_12] : memref<1x8x8x256xf32, #tpu.memory_space<vmem>>, vector<1x1x8x256xf32>
    %18 = vector.shape_cast %17 : vector<1x1x8x256xf32> to vector<8x256xf32>
    %19 = vector.shape_cast %5 : vector<8x1xi1> to vector<8x1xi1>
    %20 = vector.broadcast %19 : vector<8x1xi1> to vector<8x256xi1>
    %21 = arith.select %20, %16, %18 : vector<8x256xi1>, vector<8x256xf32>
    %c0_13 = arith.constant 0 : index
    %c1_14 = arith.constant 1 : index
    %c0_15 = arith.constant 0 : index
    %c0_16 = arith.constant 0 : index
    %22 = vector.load %arg4[%c0_13, %c1_14, %c0_15, %c0_16] : memref<1x8x8x256xf32, #tpu.memory_space<vmem>>, vector<1x1x8x256xf32>
    %23 = vector.shape_cast %22 : vector<1x1x8x256xf32> to vector<8x256xf32>
    %24 = vector.shape_cast %21 : vector<8x256xf32> to vector<1x1x8x256xf32>
    tpu.vector_store %arg4[%c0_13, %c1_14, %c0_15, %c0_16], %24 {strides = array<i32>} : memref<1x8x8x256xf32, #tpu.memory_space<vmem>>, vector<1x1x8x256xf32>,
    %c0_17 = arith.constant 0 : index
    %c3 = arith.constant 3 : index
    %c0_18 = arith.constant 0 : index
    %c0_19 = arith.constant 0 : index
    %25 = vector.load %arg3[%c0_17, %c3, %c0_18, %c0_19] : memref<1x8x8x256xf32, #tpu.memory_space<vmem>>, vector<1x1x8x256xf32>
    %26 = vector.shape_cast %25 : vector<1x1x8x256xf32> to vector<8x256xf32>
    %c0_20 = arith.constant 0 : index
    %c1_21 = arith.constant 1 : index
    %c0_22 = arith.constant 0 : index
    %c0_23 = arith.constant 0 : index
    %27 = vector.load %arg3[%c0_20, %c1_21, %c0_22, %c0_23] : memref<1x8x8x256xf32, #tpu.memory_space<vmem>>, vector<1x1x8x256xf32>
    %28 = vector.shape_cast %27 : vector<1x1x8x256xf32> to vector<8x256xf32>
    %29 = vector.shape_cast %5 : vector<8x1xi1> to vector<8x1xi1>
    %30 = vector.broadcast %29 : vector<8x1xi1> to vector<8x256xi1>
    %31 = arith.select %30, %26, %28 : vector<8x256xi1>, vector<8x256xf32>
    %c0_24 = arith.constant 0 : index
    %c2_25 = arith.constant 2 : index
    %c0_26 = arith.constant 0 : index
    %c0_27 = arith.constant 0 : index
    %32 = vector.load %arg4[%c0_24, %c2_25, %c0_26, %c0_27] : memref<1x8x8x256xf32, #tpu.memory_space<vmem>>, vector<1x1x8x256xf32>
    %33 = vector.shape_cast %32 : vector<1x1x8x256xf32> to vector<8x256xf32>
    %34 = vector.shape_cast %31 : vector<8x256xf32> to vector<1x1x8x256xf32>
    tpu.vector_store %arg4[%c0_24, %c2_25, %c0_26, %c0_27], %34 {strides = array<i32>} : memref<1x8x8x256xf32, #tpu.memory_space<vmem>>, vector<1x1x8x256xf32>,
    %c0_28 = arith.constant 0 : index
    %c4 = arith.constant 4 : index
    %c0_29 = arith.constant 0 : index
    %c0_30 = arith.constant 0 : index
    %35 = vector.load %arg3[%c0_28, %c4, %c0_29, %c0_30] : memref<1x8x8x256xf32, #tpu.memory_space<vmem>>, vector<1x1x8x256xf32>
    %36 = vector.shape_cast %35 : vector<1x1x8x256xf32> to vector<8x256xf32>
    %c0_31 = arith.constant 0 : index
    %c2_32 = arith.constant 2 : index
    %c0_33 = arith.constant 0 : index
    %c0_34 = arith.constant 0 : index
    %37 = vector.load %arg3[%c0_31, %c2_32, %c0_33, %c0_34] : memref<1x8x8x256xf32, #tpu.memory_space<vmem>>, vector<1x1x8x256xf32>
    %38 = vector.shape_cast %37 : vector<1x1x8x256xf32> to vector<8x256xf32>
    %39 = vector.shape_cast %5 : vector<8x1xi1> to vector<8x1xi1>
    %40 = vector.broadcast %39 : vector<8x1xi1> to vector<8x256xi1>
    %41 = arith.select %40, %36, %38 : vector<8x256xi1>, vector<8x256xf32>
    %c0_35 = arith.constant 0 : index
    %c3_36 = arith.constant 3 : index
    %c0_37 = arith.constant 0 : index
    %c0_38 = arith.constant 0 : index
    %42 = vector.load %arg4[%c0_35, %c3_36, %c0_37, %c0_38] : memref<1x8x8x256xf32, #tpu.memory_space<vmem>>, vector<1x1x8x256xf32>
    %43 = vector.shape_cast %42 : vector<1x1x8x256xf32> to vector<8x256xf32>
    %44 = vector.shape_cast %41 : vector<8x256xf32> to vector<1x1x8x256xf32>
    tpu.vector_store %arg4[%c0_35, %c3_36, %c0_37, %c0_38], %44 {strides = array<i32>} : memref<1x8x8x256xf32, #tpu.memory_space<vmem>>, vector<1x1x8x256xf32>,
    %c0_39 = arith.constant 0 : index
    %c5 = arith.constant 5 : index
    %c0_40 = arith.constant 0 : index
    %c0_41 = arith.constant 0 : index
    %45 = vector.load %arg3[%c0_39, %c5, %c0_40, %c0_41] : memref<1x8x8x256xf32, #tpu.memory_space<vmem>>, vector<1x1x8x256xf32>
    %46 = vector.shape_cast %45 : vector<1x1x8x256xf32> to vector<8x256xf32>
    %c0_42 = arith.constant 0 : index
    %c3_43 = arith.constant 3 : index
    %c0_44 = arith.constant 0 : index
    %c0_45 = arith.constant 0 : index
    %47 = vector.load %arg3[%c0_42, %c3_43, %c0_44, %c0_45] : memref<1x8x8x256xf32, #tpu.memory_space<vmem>>, vector<1x1x8x256xf32>
    %48 = vector.shape_cast %47 : vector<1x1x8x256xf32> to vector<8x256xf32>
    %49 = vector.shape_cast %5 : vector<8x1xi1> to vector<8x1xi1>
    %50 = vector.broadcast %49 : vector<8x1xi1> to vector<8x256xi1>
    %51 = arith.select %50, %46, %48 : vector<8x256xi1>, vector<8x256xf32>
    %c0_46 = arith.constant 0 : index
    %c4_47 = arith.constant 4 : index
    %c0_48 = arith.constant 0 : index
    %c0_49 = arith.constant 0 : index
    %52 = vector.load %arg4[%c0_46, %c4_47, %c0_48, %c0_49] : memref<1x8x8x256xf32, #tpu.memory_space<vmem>>, vector<1x1x8x256xf32>
    %53 = vector.shape_cast %52 : vector<1x1x8x256xf32> to vector<8x256xf32>
    %54 = vector.shape_cast %51 : vector<8x256xf32> to vector<1x1x8x256xf32>
    tpu.vector_store %arg4[%c0_46, %c4_47, %c0_48, %c0_49], %54 {strides = array<i32>} : memref<1x8x8x256xf32, #tpu.memory_space<vmem>>, vector<1x1x8x256xf32>,
    %c0_50 = arith.constant 0 : index
    %c6 = arith.constant 6 : index
    %c0_51 = arith.constant 0 : index
    %c0_52 = arith.constant 0 : index
    %55 = vector.load %arg3[%c0_50, %c6, %c0_51, %c0_52] : memref<1x8x8x256xf32, #tpu.memory_space<vmem>>, vector<1x1x8x256xf32>
    %56 = vector.shape_cast %55 : vector<1x1x8x256xf32> to vector<8x256xf32>
    %c0_53 = arith.constant 0 : index
    %c4_54 = arith.constant 4 : index
    %c0_55 = arith.constant 0 : index
    %c0_56 = arith.constant 0 : index
    %57 = vector.load %arg3[%c0_53, %c4_54, %c0_55, %c0_56] : memref<1x8x8x256xf32, #tpu.memory_space<vmem>>, vector<1x1x8x256xf32>
    %58 = vector.shape_cast %57 : vector<1x1x8x256xf32> to vector<8x256xf32>
    %59 = vector.shape_cast %5 : vector<8x1xi1> to vector<8x1xi1>
    %60 = vector.broadcast %59 : vector<8x1xi1> to vector<8x256xi1>
    %61 = arith.select %60, %56, %58 : vector<8x256xi1>, vector<8x256xf32>
    %c0_57 = arith.constant 0 : index
    %c5_58 = arith.constant 5 : index
    %c0_59 = arith.constant 0 : index
    %c0_60 = arith.constant 0 : index
    %62 = vector.load %arg4[%c0_57, %c5_58, %c0_59, %c0_60] : memref<1x8x8x256xf32, #tpu.memory_space<vmem>>, vector<1x1x8x256xf32>
    %63 = vector.shape_cast %62 : vector<1x1x8x256xf32> to vector<8x256xf32>
    %64 = vector.shape_cast %61 : vector<8x256xf32> to vector<1x1x8x256xf32>
    tpu.vector_store %arg4[%c0_57, %c5_58, %c0_59, %c0_60], %64 {strides = array<i32>} : memref<1x8x8x256xf32, #tpu.memory_space<vmem>>, vector<1x1x8x256xf32>,
    %c0_61 = arith.constant 0 : index
    %c7 = arith.constant 7 : index
    %c0_62 = arith.constant 0 : index
    %c0_63 = arith.constant 0 : index
    %65 = vector.load %arg3[%c0_61, %c7, %c0_62, %c0_63] : memref<1x8x8x256xf32, #tpu.memory_space<vmem>>, vector<1x1x8x256xf32>
    %66 = vector.shape_cast %65 : vector<1x1x8x256xf32> to vector<8x256xf32>
    %c0_64 = arith.constant 0 : index
    %c5_65 = arith.constant 5 : index
    %c0_66 = arith.constant 0 : index
    %c0_67 = arith.constant 0 : index
    %67 = vector.load %arg3[%c0_64, %c5_65, %c0_66, %c0_67] : memref<1x8x8x256xf32, #tpu.memory_space<vmem>>, vector<1x1x8x256xf32>
    %68 = vector.shape_cast %67 : vector<1x1x8x256xf32> to vector<8x256xf32>
    %69 = vector.shape_cast %5 : vector<8x1xi1> to vector<8x1xi1>
    %70 = vector.broadcast %69 : vector<8x1xi1> to vector<8x256xi1>
    %71 = arith.select %70, %66, %68 : vector<8x256xi1>, vector<8x256xf32>
    %c0_68 = arith.constant 0 : index
    %c6_69 = arith.constant 6 : index
    %c0_70 = arith.constant 0 : index
    %c0_71 = arith.constant 0 : index
    %72 = vector.load %arg4[%c0_68, %c6_69, %c0_70, %c0_71] : memref<1x8x8x256xf32, #tpu.memory_space<vmem>>, vector<1x1x8x256xf32>
    %73 = vector.shape_cast %72 : vector<1x1x8x256xf32> to vector<8x256xf32>
    %74 = vector.shape_cast %71 : vector<8x256xf32> to vector<1x1x8x256xf32>
    tpu.vector_store %arg4[%c0_68, %c6_69, %c0_70, %c0_71], %74 {strides = array<i32>} : memref<1x8x8x256xf32, #tpu.memory_space<vmem>>, vector<1x1x8x256xf32>,
    %c0_72 = arith.constant 0 : index
    %c6_73 = arith.constant 6 : index
    %c0_74 = arith.constant 0 : index
    %c0_75 = arith.constant 0 : index
    %75 = vector.load %arg3[%c0_72, %c6_73, %c0_74, %c0_75] : memref<1x8x8x256xf32, #tpu.memory_space<vmem>>, vector<1x1x8x256xf32>
    %76 = vector.shape_cast %75 : vector<1x1x8x256xf32> to vector<8x256xf32>
    %77 = vector.shape_cast %5 : vector<8x1xi1> to vector<8x1xi1>
    %78 = vector.broadcast %77 : vector<8x1xi1> to vector<8x256xi1>
    %79 = arith.select %78, %6, %76 : vector<8x256xi1>, vector<8x256xf32>
    %c0_76 = arith.constant 0 : index
    %c7_77 = arith.constant 7 : index
    %c0_78 = arith.constant 0 : index
    %c0_79 = arith.constant 0 : index
    %80 = vector.load %arg4[%c0_76, %c7_77, %c0_78, %c0_79] : memref<1x8x8x256xf32, #tpu.memory_space<vmem>>, vector<1x1x8x256xf32>
    %81 = vector.shape_cast %80 : vector<1x1x8x256xf32> to vector<8x256xf32>
    %82 = vector.shape_cast %79 : vector<8x256xf32> to vector<1x1x8x256xf32>
    tpu.vector_store %arg4[%c0_76, %c7_77, %c0_78, %c0_79], %82 {strides = array<i32>} : memref<1x8x8x256xf32, #tpu.memory_space<vmem>>, vector<1x1x8x256xf32>,
    return
  }
  func.func @transform_0(%arg0: i32, %arg1: i32, %arg2: i32) -> (i32, i32, i32, i32) {
    %c0_i32 = arith.constant 0 : i32
    %c0_i32_0 = arith.constant 0 : i32
    return %arg0, %c0_i32, %arg1, %arg2 : i32, i32, i32, i32
  }
  func.func @transform_1(%arg0: i32, %arg1: i32, %arg2: i32) -> (i32, i32, i32, i32) {
    %c0_i32 = arith.constant 0 : i32
    %c0_i32_0 = arith.constant 0 : i32
    return %arg0, %c0_i32, %arg1, %arg2 : i32, i32, i32, i32
  }
}

</mosaic_0001>

<llo_original>
// kernel: tsm_forward.1
$region0: #{tsm_forward.1}
  #allocation0 [shape = 'u32[]', space=smem, size = 0x4, offset = 0x4, fixed_abs, tag = 'smem constant byte address 0x4 - core index']
  #allocation1 [shape = 'u32[72,128]{1,0:T(1,128)}', space=vmem, size = 0x9000, scoped, tag = 'internal scratch']
  %s0 = inlined_call_operand.vmem [shape: f32[2,8,32,256], index: 0, kind: input, shape index: {}, may-alias: {0,1}]
  %s1 = inlined_call_operand.vmem [shape: f32[2,8,32,256], index: 1, kind: output, shape index: {}, may-alias: {0,1}]
  %s2 = sld [smem:[#allocation0]]
  $region79: #{tsm_forward.1} parent=0
    _
  %s4 = ssub.s32 1, %s2
  %s5 = scalar_select 0, %s4, %s2
  $region1: #{tsm_forward.1} parent=0
    #allocation2 [shape = 'u8[131072]{0}', space=vmem, size = 0x20000, scoped, tag = 'input window, operand 0']
    #allocation3 [shape = 'u8[131072]{0}', space=vmem, size = 0x20000, scoped, tag = 'output window, operand 0']
    loop: start=0, step=1, limit=4
    $region2: #{tsm_forward.1} parent=1 // loop_pre_header
      _
    $region3: #{tsm_forward.1} parent=1 // loop_header
      %s7 = sphi 0, %s11
      %p8 = scmp.ge.s32.totalorder %s7, 4
      %s14 = sphi 0, %s33
      %s15 = sphi 0, %s29
      %s16 = sphi 0, %s25
      %s17 = sphi 0, %s14
      %s18 = sphi 0, %s15
      %s19 = sphi 0, %s16
      %s20 = sphi 0, %s17
      %s21 = sphi 0, %s18
      %s22 = sphi 0, %s19
      %s40 = sphi 0, %s42
      %s43 = sphi 0, %s40
      %s44 = sphi 0, %s43
      %s60 = sphi 0, %s44
      %s70 = sphi 0, %s72
      %s73 = sphi 0, %s70
      %s74 = sphi 0, %s73
      %s90 = sphi 0, %s74
    $region4: #{tsm_forward.1} parent=1 // loop_header_branch
      %10 = sbr.rel (%p8) target = $region8
    $region5: #{tsm_forward.1} parent=1 // loop_body
      %s12 = ssub.s32 %s7, 1
      %s13 = ssub.s32 %s7, 2
      %s23 = sadd.s32 1, %s16
      %p24 = scmp.ge.s32.totalorder %s23, 1
      %s25 = scalar_select %p24, 0, %s23
      %s26 = sadd.s32 1, %s15
      %s27 = scalar_select %p24, %s26, %s15
      %p28 = scmp.ge.s32.totalorder %s27, 1
      %s29 = scalar_select %p28, 0, %s27
      %s30 = sadd.s32 1, %s14
      %s31 = scalar_select %p28, %s30, %s14
      %p32 = scmp.ge.s32.totalorder %s31, 2
      %s33 = scalar_select %p32, 0, %s31
      %s34 = ssub.s32 %s14, %s33
      %s35 = ssub.s32 %s15, %s29
      %s36 = sor.u32 %s34, %s35
      %s37 = ssub.s32 %s16, %s25
      %s38 = sor.u32 %s36, %s37
      %p39 = scmp.eq.s32.totalorder %s38, 0
      %s41 = sadd.s32 %s40, 1
      %s42 = scalar_select %p39, %s40, %s41
      %p45 = pneg %p39
      %p46 = scmp.eq.s32.totalorder %s7, 1
      %p47 = por %p45, %p46
      %p48 = scmp.ne.s32.totalorder %s40, %s43
      %p49 = scmp.eq.s32.totalorder %s7, 0
      %p50 = por %p48, %p49
      %p51 = scmp.ne.s32.totalorder %s40, %s43
      %p52 = scmp.eq.s32.totalorder %s12, 1
      %p53 = por %p51, %p52
      %p54 = scmp.ne.s32.totalorder %s43, %s44
      %p55 = scmp.eq.s32.totalorder %s12, 0
      %p56 = por %p54, %p55
      %p57 = scmp.ne.s32.totalorder %s43, %s44
      %p58 = scmp.eq.s32.totalorder %s13, 1
      %p59 = por %p57, %p58
      %p61 = scmp.ne.s32.totalorder %s44, %s60
      %p62 = scmp.eq.s32.totalorder %s13, 0
      %p63 = por %p61, %p62
      %s64 = ssub.s32 %s14, %s33
      %s65 = ssub.s32 %s15, %s29
      %s66 = sor.u32 %s64, %s65
      %s67 = ssub.s32 %s16, %s25
      %s68 = sor.u32 %s66, %s67
      %p69 = scmp.eq.s32.totalorder %s68, 0
      %s71 = sadd.s32 %s70, 1
      %s72 = scalar_select %p69, %s70, %s71
      %p75 = pneg %p69
      %p76 = scmp.eq.s32.totalorder %s7, 1
      %p77 = por %p75, %p76
      %p78 = scmp.ne.s32.totalorder %s70, %s73
      %p79 = scmp.eq.s32.totalorder %s7, 0
      %p80 = por %p78, %p79
      %p81 = scmp.ne.s32.totalorder %s70, %s73
      %p82 = scmp.eq.s32.totalorder %s12, 1
      %p83 = por %p81, %p82
      %p84 = scmp.ne.s32.totalorder %s73, %s74
      %p85 = scmp.eq.s32.totalorder %s12, 0
      %p86 = por %p84, %p85
      %p87 = scmp.ne.s32.totalorder %s73, %s74
      %p88 = scmp.eq.s32.totalorder %s13, 1
      %p89 = por %p87, %p88
      %p91 = scmp.ne.s32.totalorder %s74, %s90
      %p92 = scmp.eq.s32.totalorder %s13, 0
      %p93 = por %p91, %p92
      %p94 = scmp.le.s32.totalorder 1, %s7
      %p95 = scmp.lt.s32.totalorder %s7, 3
      %p96 = pnand %p94, %p95
      %p97 = pneg %p96
      // Predicated region
      $region9: #{tsm_forward.1} parent=5 // pred_check
        _
      $region10: #{tsm_forward.1} parent=5 // pred_check_branch
        %99 = sbr.rel (%p96) target = $region12
      $region11: #{tsm_forward.1} parent=5 // pred_region
        %s100 = ssub.s32 %s7, 1
      $region12: #{tsm_forward.1} parent=5 // pred_fallthru
        _
      %p101 = scmp.lt.s32.totalorder %s7, 2
      // Predicated region
      $region13: #{tsm_forward.1} parent=5 // pred_check
        %p102 = pneg %p101
      $region14: #{tsm_forward.1} parent=5 // pred_check_branch
        %104 = sbr.rel (%p102) target = $region16
      $region15: #{tsm_forward.1} parent=5 // pred_region
        // Predicated region
        $region17: #{tsm_forward.1} parent=15 // pred_check
          %p105 = pneg %p50
        $region18: #{tsm_forward.1} parent=15 // pred_check_branch
          %107 = sbr.rel (%p105) target = $region20
        $region19: #{tsm_forward.1} parent=15 // pred_region
          %s108 = sand.u32 %s40, 1
          %s109 = sand.u32 %s40, 1
          %s110 = smul.addr %s109, 128
          %s111 = scalar_lea.vmem [#allocation2], %s110
          %s112 = smul.u32 2, %s16
          %s113 = smul.addr %s15, 2
          %s114 = sadd.s32 %s112, %s113
          %s115 = smul.addr %s14, 64
          %s116 = sadd.s32 %s114, %s115
          %s117 = smul.addr %s116, 8
          %s118 = scalar_lea.vmem %s0, %s117
          // Predicated region
          $region21: #{tsm_forward.1} parent=19 // pred_check
            _
          $region22: #{tsm_forward.1} parent=19 // pred_check_branch
            %120 = sbr.rel (0) target = $region24
          $region23: #{tsm_forward.1} parent=19 // pred_region
            // Predicated region
            $region25: #{tsm_forward.1} parent=23 // pred_check
              _
            $region26: #{tsm_forward.1} parent=23 // pred_check_branch
              %122 = sbr.rel (0) target = $region28
            $region27: #{tsm_forward.1} parent=23 // pred_region
              loop: start=0, step=1, limit=1
              $region29: #{tsm_forward.1} parent=27 // loop_pre_header
                _
              $region30: #{tsm_forward.1} parent=27 // loop_header
                %s124 = sphi 0, %s128
                %p125 = scmp.ge.s32.totalorder %s124, 1
                %s129 = sphi %s118, %s118
                %s130 = sphi %s111, %s111
              $region31: #{tsm_forward.1} parent=27 // loop_header_branch
                %127 = sbr.rel (%p125) target = $region35
              $region32: #{tsm_forward.1} parent=27 // loop_body
                %v131 = vld [vmem:[%s129] sm:$0xff]
                %132 = vst [vmem:[%s130] sm:$0xff] %v131
                %v133 = vld [vmem:[%s129 + $0x8] sm:$0xff]
                %134 = vst [vmem:[%s130 + $0x8] sm:$0xff] %v133
                %v135 = vld [vmem:[%s129 + $0x40] sm:$0xff]
                %136 = vst [vmem:[%s130 + $0x10] sm:$0xff] %v135
                %v137 = vld [vmem:[%s129 + $0x48] sm:$0xff]
                %138 = vst [vmem:[%s130 + $0x18] sm:$0xff] %v137
                %v139 = vld [vmem:[%s129 + $0x80] sm:$0xff]
                %140 = vst [vmem:[%s130 + $0x20] sm:$0xff] %v139
                %v141 = vld [vmem:[%s129 + $0x88] sm:$0xff]
                %142 = vst [vmem:[%s130 + $0x28] sm:$0xff] %v141
                %v143 = vld [vmem:[%s129 + $0xc0] sm:$0xff]
                %144 = vst [vmem:[%s130 + $0x30] sm:$0xff] %v143
                %v145 = vld [vmem:[%s129 + $0xc8] sm:$0xff]
                %146 = vst [vmem:[%s130 + $0x38] sm:$0xff] %v145
                %v147 = vld [vmem:[%s129 + $0x100] sm:$0xff]
                %148 = vst [vmem:[%s130 + $0x40] sm:$0xff] %v147
                %v149 = vld [vmem:[%s129 + $0x108] sm:$0xff]
                %150 = vst [vmem:[%s130 + $0x48] sm:$0xff] %v149
                %v151 = vld [vmem:[%s129 + $0x140] sm:$0xff]
                %152 = vst [vmem:[%s130 + $0x50] sm:$0xff] %v151
                %v153 = vld [vmem:[%s129 + $0x148] sm:$0xff]
                %154 = vst [vmem:[%s130 + $0x58] sm:$0xff] %v153
                %v155 = vld [vmem:[%s129 + $0x180] sm:$0xff]
                %156 = vst [vmem:[%s130 + $0x60] sm:$0xff] %v155
                %v157 = vld [vmem:[%s129 + $0x188] sm:$0xff]
                %158 = vst [vmem:[%s130 + $0x68] sm:$0xff] %v157
                %v159 = vld [vmem:[%s129 + $0x1c0] sm:$0xff]
                %160 = vst [vmem:[%s130 + $0x70] sm:$0xff] %v159
                %v161 = vld [vmem:[%s129 + $0x1c8] sm:$0xff]
                %162 = vst [vmem:[%s130 + $0x78] sm:$0xff] %v161
              $region33: #{tsm_forward.1} parent=27 // loop_footer
                %s128 = sadd.s32 1, %s124
              $region34: #{tsm_forward.1} parent=27 // loop_footer_branch
                %123 = sbr.rel target = $region30
              $region35: #{tsm_forward.1} parent=27 // loop_exit
                _
            $region28: #{tsm_forward.1} parent=23 // pred_fallthru
              _
            // Predicated region
            $region36: #{tsm_forward.1} parent=23 // pred_check
              _
            $region37: #{tsm_forward.1} parent=23 // pred_check_branch
              %164 = sbr.rel target = $region39
            $region38: #{tsm_forward.1} parent=23 // pred_region
              _
            $region39: #{tsm_forward.1} parent=23 // pred_fallthru
              _
          $region24: #{tsm_forward.1} parent=19 // pred_fallthru
            _
          %165 = vnop
        $region20: #{tsm_forward.1} parent=15 // pred_fallthru
          _
      $region16: #{tsm_forward.1} parent=5 // pred_fallthru
        _
      %p166 = scmp.le.s32.totalorder 1, %s7
      %p167 = scmp.lt.s32.totalorder %s7, 3
      %p168 = pnand %p166, %p167
      %p169 = pneg %p168
      // Predicated region
      $region40: #{tsm_forward.1} parent=5 // pred_check
        _
      $region41: #{tsm_forward.1} parent=5 // pred_check_branch
        %171 = sbr.rel (%p168) target = $region43
      $region42: #{tsm_forward.1} parent=5 // pred_region
        %s172 = ssub.s32 %s7, 1
        %s173 = sand.u32 %s43, 1
        %s174 = sand.u32 %s43, 1
        %s175 = smul.addr %s174, 128
        %s176 = scalar_lea.vmem [#allocation2], %s175
        // Predicated region
        $region44: #{tsm_forward.1} parent=42 // pred_check
          %p177 = pneg %p56
        $region45: #{tsm_forward.1} parent=42 // pred_check_branch
          %179 = sbr.rel (%p177) target = $region47
        $region46: #{tsm_forward.1} parent=42 // pred_region
          _
        $region47: #{tsm_forward.1} parent=42 // pred_fallthru
          _
        %s180 = sand.u32 %s43, 1
        %s181 = sand.u32 %s43, 1
        %s182 = smul.addr %s181, 128
        %s183 = scalar_lea.vmem [#allocation2], %s182
        %p184 = pneg %p56
        %p185 = pneg %p53
        %p186 = pneg %p86
        %p187 = pneg %p83
        %s188 = sand.u32 %s73, 1
        %s189 = sand.u32 %s73, 1
        %s190 = smul.addr %s189, 128
        %s191 = scalar_lea.vmem [#allocation3], %s190
        %s192 = smul.u32 2, %s19
        %s193 = smul.u32 2, %s19
        %s194 = smul.u32 %s18, 8
        %v195 = vlaneseq
        %v196 = vshrl.u32 %v195, 7
        %v197 = vstv %s194
        %v198 = vadd.s32 %v197, %v196
        %vm199 = vcmp.lt.s32.totalorder %v198, 4
        %s200 = scalar_lea.vmem %s176, 16 [#allocation2]
        %v201 = vld [vmem:[%s200] sm:$0xff]
        %v202 = vld [vmem:[%s200 + $0x8] sm:$0xff]
        %v203 = vsel %vm199, 1, 0
        %vm204 = vcmp.eq.s32.totalorder %v203, 1
        %v205 = vsel %vm204, %v201, 0.0
        %v206 = vsel %vm204, %v202, 0.0
        %207 = vst [vmem:[%s191] sm:$0xff] %v205
        %208 = vst [vmem:[%s191 + $0x8] sm:$0xff] %v206
        %s209 = scalar_lea.vmem %s176, 32 [#allocation2]
        %v210 = vld [vmem:[%s209] sm:$0xff]
        %v211 = vld [vmem:[%s209 + $0x8] sm:$0xff]
        %v212 = vld [vmem:[%s176] sm:$0xff]
        %v213 = vld [vmem:[%s176 + $0x8] sm:$0xff]
        %v214 = vsel %vm204, %v210, %v212
        %v215 = vsel %vm204, %v211, %v213
        %s216 = scalar_lea.vmem %s191, 16 [#allocation3]
        %217 = vst [vmem:[%s216] sm:$0xff] %v214
        %218 = vst [vmem:[%s216 + $0x8] sm:$0xff] %v215
        %s219 = scalar_lea.vmem %s176, 48 [#allocation2]
        %v220 = vld [vmem:[%s219] sm:$0xff]
        %v221 = vld [vmem:[%s219 + $0x8] sm:$0xff]
        %v222 = vld [vmem:[%s200] sm:$0xff]
        %v223 = vld [vmem:[%s200 + $0x8] sm:$0xff]
        %v224 = vsel %vm204, %v220, %v222
        %v225 = vsel %vm204, %v221, %v223
        %s226 = scalar_lea.vmem %s191, 32 [#allocation3]
        %227 = vst [vmem:[%s226] sm:$0xff] %v224
        %228 = vst [vmem:[%s226 + $0x8] sm:$0xff] %v225
        %s229 = scalar_lea.vmem %s176, 64 [#allocation2]
        %v230 = vld [vmem:[%s229] sm:$0xff]
        %v231 = vld [vmem:[%s229 + $0x8] sm:$0xff]
        %v232 = vld [vmem:[%s209] sm:$0xff]
        %v233 = vld [vmem:[%s209 + $0x8] sm:$0xff]
        %v234 = vsel %vm204, %v230, %v232
        %v235 = vsel %vm204, %v231, %v233
        %s236 = scalar_lea.vmem %s191, 48 [#allocation3]
        %237 = vst [vmem:[%s236] sm:$0xff] %v234
        %238 = vst [vmem:[%s236 + $0x8] sm:$0xff] %v235
        %s239 = scalar_lea.vmem %s176, 80 [#allocation2]
        %v240 = vld [vmem:[%s239] sm:$0xff]
        %v241 = vld [vmem:[%s239 + $0x8] sm:$0xff]
        %v242 = vld [vmem:[%s219] sm:$0xff]
        %v243 = vld [vmem:[%s219 + $0x8] sm:$0xff]
        %v244 = vsel %vm204, %v240, %v242
        %v245 = vsel %vm204, %v241, %v243
        %s246 = scalar_lea.vmem %s191, 64 [#allocation3]
        %247 = vst [vmem:[%s246] sm:$0xff] %v244
        %248 = vst [vmem:[%s246 + $0x8] sm:$0xff] %v245
        %s249 = scalar_lea.vmem %s176, 96 [#allocation2]
        %v250 = vld [vmem:[%s249] sm:$0xff]
        %v251 = vld [vmem:[%s249 + $0x8] sm:$0xff]
        %v252 = vld [vmem:[%s229] sm:$0xff]
        %v253 = vld [vmem:[%s229 + $0x8] sm:$0xff]
        %v254 = vsel %vm204, %v250, %v252
        %v255 = vsel %vm204, %v251, %v253
        %s256 = scalar_lea.vmem %s191, 80 [#allocation3]
        %257 = vst [vmem:[%s256] sm:$0xff] %v254
        %258 = vst [vmem:[%s256 + $0x8] sm:$0xff] %v255
        %s259 = scalar_lea.vmem %s176, 112 [#allocation2]
        %v260 = vld [vmem:[%s259] sm:$0xff]
        %v261 = vld [vmem:[%s259 + $0x8] sm:$0xff]
        %v262 = vld [vmem:[%s239] sm:$0xff]
        %v263 = vld [vmem:[%s239 + $0x8] sm:$0xff]
        %v264 = vsel %vm204, %v260, %v262
        %v265 = vsel %vm204, %v261, %v263
        %s266 = scalar_lea.vmem %s191, 96 [#allocation3]
        %267 = vst [vmem:[%s266] sm:$0xff] %v264
        %268 = vst [vmem:[%s266 + $0x8] sm:$0xff] %v265
        %v269 = vld [vmem:[%s249] sm:$0xff]
        %v270 = vld [vmem:[%s249 + $0x8] sm:$0xff]
        %v271 = vsel %vm204, 0.0, %v269
        %v272 = vsel %vm204, 0.0, %v270
        %s273 = scalar_lea.vmem %s191, 112 [#allocation3]
        %274 = vst [vmem:[%s273] sm:$0xff] %v271
        %275 = vst [vmem:[%s273 + $0x8] sm:$0xff] %v272
        %s276 = sand.u32 %s73, 1
        %s277 = sand.u32 %s73, 1
        %s278 = smul.addr %s277, 128
        %s279 = scalar_lea.vmem [#allocation3], %s278
        // Predicated region
        $region48: #{tsm_forward.1} parent=42 // pred_check
          %p280 = pneg %p83
        $region49: #{tsm_forward.1} parent=42 // pred_check_branch
          %282 = sbr.rel (%p280) target = $region51
        $region50: #{tsm_forward.1} parent=42 // pred_region
          %s283 = smul.u32 2, %s19
          %s284 = smul.addr %s18, 2
          %s285 = sadd.s32 %s283, %s284
          %s286 = smul.addr %s17, 64
          %s287 = sadd.s32 %s285, %s286
          %s288 = smul.addr %s287, 8
          %s289 = scalar_lea.vmem %s1, %s288
          // Predicated region
          $region52: #{tsm_forward.1} parent=50 // pred_check
            _
          $region53: #{tsm_forward.1} parent=50 // pred_check_branch
            %291 = sbr.rel (0) target = $region55
          $region54: #{tsm_forward.1} parent=50 // pred_region
            // Predicated region
            $region56: #{tsm_forward.1} parent=54 // pred_check
              _
            $region57: #{tsm_forward.1} parent=54 // pred_check_branch
              %293 = sbr.rel (0) target = $region59
            $region58: #{tsm_forward.1} parent=54 // pred_region
              loop: start=0, step=1, limit=1
              $region60: #{tsm_forward.1} parent=58 // loop_pre_header
                _
              $region61: #{tsm_forward.1} parent=58 // loop_header
                %s295 = sphi 0, %s299
                %p296 = scmp.ge.s32.totalorder %s295, 1
                %s300 = sphi %s279, %s279
                %s301 = sphi %s289, %s289
              $region62: #{tsm_forward.1} parent=58 // loop_header_branch
                %298 = sbr.rel (%p296) target = $region66
              $region63: #{tsm_forward.1} parent=58 // loop_body
                %v302 = vld [vmem:[%s300] sm:$0xff]
                %303 = vst [vmem:[%s301] sm:$0xff] %v302
                %v304 = vld [vmem:[%s300 + $0x8] sm:$0xff]
                %305 = vst [vmem:[%s301 + $0x8] sm:$0xff] %v304
                %v306 = vld [vmem:[%s300 + $0x10] sm:$0xff]
                %307 = vst [vmem:[%s301 + $0x40] sm:$0xff] %v306
                %v308 = vld [vmem:[%s300 + $0x18] sm:$0xff]
                %309 = vst [vmem:[%s301 + $0x48] sm:$0xff] %v308
                %v310 = vld [vmem:[%s300 + $0x20] sm:$0xff]
                %311 = vst [vmem:[%s301 + $0x80] sm:$0xff] %v310
                %v312 = vld [vmem:[%s300 + $0x28] sm:$0xff]
                %313 = vst [vmem:[%s301 + $0x88] sm:$0xff] %v312
                %v314 = vld [vmem:[%s300 + $0x30] sm:$0xff]
                %315 = vst [vmem:[%s301 + $0xc0] sm:$0xff] %v314
                %v316 = vld [vmem:[%s300 + $0x38] sm:$0xff]
                %317 = vst [vmem:[%s301 + $0xc8] sm:$0xff] %v316
                %v318 = vld [vmem:[%s300 + $0x40] sm:$0xff]
                %319 = vst [vmem:[%s301 + $0x100] sm:$0xff] %v318
                %v320 = vld [vmem:[%s300 + $0x48] sm:$0xff]
                %321 = vst [vmem:[%s301 + $0x108] sm:$0xff] %v320
                %v322 = vld [vmem:[%s300 + $0x50] sm:$0xff]
                %323 = vst [vmem:[%s301 + $0x140] sm:$0xff] %v322
                %v324 = vld [vmem:[%s300 + $0x58] sm:$0xff]
                %325 = vst [vmem:[%s301 + $0x148] sm:$0xff] %v324
                %v326 = vld [vmem:[%s300 + $0x60] sm:$0xff]
                %327 = vst [vmem:[%s301 + $0x180] sm:$0xff] %v326
                %v328 = vld [vmem:[%s300 + $0x68] sm:$0xff]
                %329 = vst [vmem:[%s301 + $0x188] sm:$0xff] %v328
                %v330 = vld [vmem:[%s300 + $0x70] sm:$0xff]
                %331 = vst [vmem:[%s301 + $0x1c0] sm:$0xff] %v330
                %v332 = vld [vmem:[%s300 + $0x78] sm:$0xff]
                %333 = vst [vmem:[%s301 + $0x1c8] sm:$0xff] %v332
              $region64: #{tsm_forward.1} parent=58 // loop_footer
                %s299 = sadd.s32 1, %s295
              $region65: #{tsm_forward.1} parent=58 // loop_footer_branch
                %294 = sbr.rel target = $region61
              $region66: #{tsm_forward.1} parent=58 // loop_exit
                _
            $region59: #{tsm_forward.1} parent=54 // pred_fallthru
              _
            // Predicated region
            $region67: #{tsm_forward.1} parent=54 // pred_check
              _
            $region68: #{tsm_forward.1} parent=54 // pred_check_branch
              %335 = sbr.rel target = $region70
            $region69: #{tsm_forward.1} parent=54 // pred_region
              _
            $region70: #{tsm_forward.1} parent=54 // pred_fallthru
              _
          $region55: #{tsm_forward.1} parent=50 // pred_fallthru
            _
          %336 = vnop
        $region51: #{tsm_forward.1} parent=42 // pred_fallthru
          _
      $region43: #{tsm_forward.1} parent=5 // pred_fallthru
        _
      %p337 = scmp.le.s32.totalorder 2, %s7
      // Predicated region
      $region71: #{tsm_forward.1} parent=5 // pred_check
        %p338 = pneg %p337
      $region72: #{tsm_forward.1} parent=5 // pred_check_branch
        %340 = sbr.rel (%p338) target = $region74
      $region73: #{tsm_forward.1} parent=5 // pred_region
        %s341 = ssub.s32 %s7, 2
        // Predicated region
        $region75: #{tsm_forward.1} parent=73 // pred_check
          %p342 = pneg %p89
        $region76: #{tsm_forward.1} parent=73 // pred_check_branch
          %344 = sbr.rel (%p342) target = $region78
        $region77: #{tsm_forward.1} parent=73 // pred_region
          %s345 = sand.u32 %s74, 1
          %s346 = sand.u32 %s74, 1
          %s347 = smul.addr %s346, 128
          %s348 = scalar_lea.vmem [#allocation3], %s347
        $region78: #{tsm_forward.1} parent=73 // pred_fallthru
          _
      $region74: #{tsm_forward.1} parent=5 // pred_fallthru
        _
    $region6: #{tsm_forward.1} parent=1 // loop_footer
      %s11 = sadd.s32 1, %s7
    $region7: #{tsm_forward.1} parent=1 // loop_footer_branch
      %6 = sbr.rel target = $region3
    $region8: #{tsm_forward.1} parent=1 // loop_exit
      _

</llo_original>
